<compile_context>
chip_gen: v7x
topology: tpu7x:2x2x1
jax: 0.10.0
libtpu: 0.0.40
codegen_flags: <defaults>
</compile_context>

<pallas_src>
import jax
import jax.numpy as jnp
from jax.experimental import pallas as pl
from jax.experimental.pallas import tpu as pltpu

# DYReLU hyper-parameters (defaults: lambda_a=1.0 -> internal 2.0,
# init_a=[1.0, 0.0], init_b=[0.0, 0.0], K2=True, use_bias=True -> exp=4).
LAMBDA_A = 2.0
INIT_A0, INIT_A1 = 1.0, 0.0
INIT_B0, INIT_B1 = 0.0, 0.0


def _dyrelu_kernel(x_ref, w1_ref, b1_ref, w2t_ref, b2c_ref, o_ref):
    # x_ref / o_ref block: (Bblk, C, HW)  (channels on sublanes, spatial on lanes)
    # w1_ref : (C, S)    b1_ref : (1, S)
    # w2t_ref: (4C, S)   b2c_ref: (4C, 1)   (transposed once in the wrapper)
    bblk, c, hw = x_ref.shape
    inv_hw = 1.0 / hw

    x = x_ref[...]                                            # (Bblk, C, HW)
    w1 = w1_ref[...]                                          # (C, S)
    b1 = b1_ref[...]                                          # (1, S)
    w2t = w2t_ref[...]                                        # (4C, S)
    b2c = b2c_ref[...]                                        # (4C, 1)

    # Global average pool over spatial (lane) axis -> (Bblk, C, 1).
    y = jnp.sum(x, axis=2, keepdims=True) * inv_hw            # (Bblk, C, 1)

    # fc1: Linear(C -> S) + ReLU.  Broadcast-mul + sublane reduce (tiny).
    #   (1, C, S) * (Bblk, C, 1) -> (Bblk, C, S) -> sum over C -> (Bblk, 1, S)
    h = jnp.sum(w1[None, :, :] * y, axis=1, keepdims=True) + b1[None, :, :]
    h = jnp.maximum(h, 0.0)                                   # (Bblk, 1, S)

    # fc2: Linear(S -> 4C) in column orientation + h_sigmoid.
    #   (1, 4C, S) * (Bblk, 1, S) -> (Bblk, 4C, S) -> sum over S -> (Bblk, 4C, 1)
    z = jnp.sum(w2t[None, :, :] * h, axis=2, keepdims=True) + b2c[None, :, :]
    z = jnp.clip(z + 3.0, 0.0, 6.0) * (1.0 / 6.0)             # relu6(z+3)/6

    # Row-wise (sublane) split into a1, b1, a2, b2 -- same order as torch.split.
    a1 = (z[:, 0 * c:1 * c] - 0.5) * LAMBDA_A + INIT_A0       # (Bblk, C, 1)
    b1v = (z[:, 1 * c:2 * c] - 0.5) + INIT_B0
    a2 = (z[:, 2 * c:3 * c] - 0.5) * LAMBDA_A + INIT_A1
    b2v = (z[:, 3 * c:4 * c] - 0.5) + INIT_B1

    # Dynamic ReLU: max of the two affine branches; (Bblk,C,1) broadcasts over lanes.
    o_ref[...] = jnp.maximum(x * a1 + b1v, x * a2 + b2v)


def _pick_bblk(B, bytes_per_batch, target_bytes=1 << 20, max_bblk=8):
    """Batch rows per grid step: large enough to amortize per-step overhead,
    small enough for VMEM, and keep grid extent >= 2 for megacore sharding."""
    bblk = max(1, min(B, max_bblk, target_bytes // max(bytes_per_batch, 1)))
    if B >= 2:
        bblk = min(bblk, max(1, B // 2))
    while B % bblk:
        bblk -= 1
    return bblk


def dyrelu_pallas(x_nchw, w1, b1, w2, b2):
    """x_nchw: (B, C, H, W) f32.  w1: (C, S), b1: (1, S), w2: (S, 4C), b2: (1, 4C)."""
    B, C, H, W = x_nchw.shape
    HW = H * W
    S = w1.shape[1]

    # Free, layout-preserving reshape (stays NCHW-native; no transposes of x).
    x = x_nchw.reshape(B, C, HW)

    # One-time tiny transposes so the kernel only splits along rows (sublanes).
    w2t = jnp.transpose(w2)                      # (4C, S)
    b2c = jnp.transpose(b2)                      # (4C, 1)

    bblk = _pick_bblk(B, C * HW * 4)
    grid = (B // bblk,)

    # VMEM budget: double-buffered input + output blocks plus small weights/slack.
    block_bytes = bblk * C * HW * 4
    vmem_bytes = min(max(4 * block_bytes + (2 << 20), 8 << 20), 64 << 20)

    out = pl.pallas_call(
        _dyrelu_kernel,
        out_shape=jax.ShapeDtypeStruct((B, C, HW), jnp.float32),
        grid_spec=pltpu.PrefetchScalarGridSpec(
            num_scalar_prefetch=0,
            grid=grid,
            in_specs=[
                pl.BlockSpec((bblk, C, HW), lambda g: (g, 0, 0)),
                pl.BlockSpec((C, S), lambda g: (0, 0)),
                pl.BlockSpec((1, S), lambda g: (0, 0)),
                pl.BlockSpec((4 * C, S), lambda g: (0, 0)),
                pl.BlockSpec((4 * C, 1), lambda g: (0, 0)),
            ],
            out_specs=pl.BlockSpec((bblk, C, HW), lambda g: (g, 0, 0)),
        ),
        compiler_params=pltpu.CompilerParams(
            dimension_semantics=("parallel",),
            vmem_limit_bytes=vmem_bytes,
        ),
    )(x, w1, b1, w2t, b2c)

    # Free reshape back to NCHW.
    return out.reshape(B, C, H, W)


def dyrelu_reference(x_nchw, w1, b1, w2, b2):
    """Pure-JAX reference mirroring the PyTorch forward (exp=4 path)."""
    B, C, H, W = x_nchw.shape
    y = jnp.mean(x_nchw, axis=(2, 3))              # (B, C)
    h = jnp.maximum(y @ w1 + b1, 0.0)              # (B, S)
    z = h @ w2 + b2                                # (B, 4C)
    z = jnp.clip(z + 3.0, 0.0, 6.0) / 6.0
    a1 = (z[:, 0 * C:1 * C] - 0.5) * LAMBDA_A + INIT_A0
    b1c = (z[:, 1 * C:2 * C] - 0.5) + INIT_B0
    a2 = (z[:, 2 * C:3 * C] - 0.5) * LAMBDA_A + INIT_A1
    b2c = (z[:, 3 * C:4 * C] - 0.5) + INIT_B1
    a1 = a1[:, :, None, None]
    b1c = b1c[:, :, None, None]
    a2 = a2[:, :, None, None]
    b2c = b2c[:, :, None, None]
    return jnp.maximum(x_nchw * a1 + b1c, x_nchw * a2 + b2c)


if __name__ == "__main__":
    key = jax.random.PRNGKey(0)
    B, C, H, W = 2, 16, 16, 16        # inp = oup = C; HW = 256 (lane-dense)
    reduction = 4
    S = C // reduction                # squeeze (reduction == 4 branch)
    EXP = 4                           # K2=True, use_bias=True

    k_x, k_w1, k_b1, k_w2, k_b2 = jax.random.split(key, 5)
    x = jax.random.normal(k_x, (B, C, H, W), dtype=jnp.float32)

    # Deterministic synthetic parameters (shapes of the nn.Linear layers in fc),
    # stored already transposed relative to torch: (in_features, out_features).
    w1 = jax.random.normal(k_w1, (C, S), dtype=jnp.float32) * 0.2
    b1 = jax.random.normal(k_b1, (1, S), dtype=jnp.float32) * 0.1
    w2 = jax.random.normal(k_w2, (S, EXP * C), dtype=jnp.float32) * 0.2
    b2 = jax.random.normal(k_b2, (1, EXP * C), dtype=jnp.float32) * 0.1

    out = dyrelu_pallas(x, w1, b1, w2, b2)
    out = jax.block_until_ready(out)

    ref = dyrelu_reference(x, w1, b1, w2, b2)
    assert out.shape == (B, C, H, W)
    assert jnp.allclose(out, ref, atol=1e-4, rtol=1e-4), "mismatch vs reference"

    print("KERNEL_OK")
</pallas_src>

<mosaic_0001>
module attributes {stable_mosaic.version = 11 : i64} {
  func.func @_dyrelu_kernel(%arg0: i32, %arg1: memref<1x16x256xf32, #tpu.memory_space<vmem>>, %arg2: memref<16x4xf32, #tpu.memory_space<vmem>>, %arg3: memref<1x4xf32, #tpu.memory_space<vmem>>, %arg4: memref<64x4xf32, #tpu.memory_space<vmem>>, %arg5: memref<64x1xf32, #tpu.memory_space<vmem>>, %arg6: memref<1x16x256xf32, #tpu.memory_space<vmem>>) attributes {dimension_semantics = [#tpu.dimension_semantics<parallel>], iteration_bounds = array<i64: 2>, scalar_prefetch = 0 : i64, scratch_operands = 0 : i64, tpu.core_type = #tpu.core_type<tc>, window_params = [{transform_indices = @transform_0, window_bounds = array<i64: 1, 16, 256>}, {pipeline_mode = #tpu.pipeline_mode<synchronous>, transform_indices = @transform_1, window_bounds = array<i64: 16, 4>}, {pipeline_mode = #tpu.pipeline_mode<synchronous>, transform_indices = @transform_2, window_bounds = array<i64: 1, 4>}, {pipeline_mode = #tpu.pipeline_mode<synchronous>, transform_indices = @transform_3, window_bounds = array<i64: 64, 4>}, {pipeline_mode = #tpu.pipeline_mode<synchronous>, transform_indices = @transform_4, window_bounds = array<i64: 64, 1>}, {transform_indices = @transform_5, window_bounds = array<i64: 1, 16, 256>}]} {
    %c0 = arith.constant 0 : index
    %c0_0 = arith.constant 0 : index
    %c0_1 = arith.constant 0 : index
    %0 = vector.load %arg1[%c0, %c0_0, %c0_1] : memref<1x16x256xf32, #tpu.memory_space<vmem>>, vector<1x16x256xf32>
    %c0_2 = arith.constant 0 : index
    %c0_3 = arith.constant 0 : index
    %1 = vector.load %arg2[%c0_2, %c0_3] : memref<16x4xf32, #tpu.memory_space<vmem>>, vector<16x4xf32>
    %c0_4 = arith.constant 0 : index
    %c0_5 = arith.constant 0 : index
    %2 = vector.load %arg3[%c0_4, %c0_5] : memref<1x4xf32, #tpu.memory_space<vmem>>, vector<1x4xf32>
    %c0_6 = arith.constant 0 : index
    %c0_7 = arith.constant 0 : index
    %3 = vector.load %arg4[%c0_6, %c0_7] : memref<64x4xf32, #tpu.memory_space<vmem>>, vector<64x4xf32>
    %c0_8 = arith.constant 0 : index
    %c0_9 = arith.constant 0 : index
    %4 = vector.load %arg5[%c0_8, %c0_9] : memref<64x1xf32, #tpu.memory_space<vmem>>, vector<64x1xf32>
    %cst = arith.constant dense<0.000000e+00> : vector<1x16xf32>
    %5 = vector.multi_reduction <add>, %0, %cst [2] : vector<1x16x256xf32> to vector<1x16xf32>
    %6 = vector.shape_cast %5 : vector<1x16xf32> to vector<1x16x1xf32>
    %cst_10 = arith.constant 3.906250e-03 : f32
    %7 = vector.broadcast %cst_10 : f32 to vector<1x16x1xf32>
    %8 = arith.mulf %6, %7 : vector<1x16x1xf32>
    %9 = vector.shape_cast %1 : vector<16x4xf32> to vector<1x16x4xf32>
    %10 = vector.broadcast %8 : vector<1x16x1xf32> to vector<1x16x4xf32>
    %11 = arith.mulf %9, %10 : vector<1x16x4xf32>
    %cst_11 = arith.constant dense<0.000000e+00> : vector<1x4xf32>
    %12 = vector.multi_reduction <add>, %11, %cst_11 [1] : vector<1x16x4xf32> to vector<1x4xf32>
    %13 = vector.shape_cast %12 : vector<1x4xf32> to vector<1x1x4xf32>
    %14 = vector.shape_cast %2 : vector<1x4xf32> to vector<1x1x4xf32>
    %15 = arith.addf %13, %14 : vector<1x1x4xf32>
    %cst_12 = arith.constant 0.000000e+00 : f32
    %16 = vector.broadcast %cst_12 : f32 to vector<1x1x4xf32>
    %17 = arith.maximumf %15, %16 : vector<1x1x4xf32>
    %18 = vector.shape_cast %3 : vector<64x4xf32> to vector<1x64x4xf32>
    %19 = vector.broadcast %17 : vector<1x1x4xf32> to vector<1x64x4xf32>
    %20 = arith.mulf %18, %19 : vector<1x64x4xf32>
    %cst_13 = arith.constant dense<0.000000e+00> : vector<1x64xf32>
    %21 = vector.multi_reduction <add>, %20, %cst_13 [2] : vector<1x64x4xf32> to vector<1x64xf32>
    %22 = vector.shape_cast %21 : vector<1x64xf32> to vector<1x64x1xf32>
    %23 = vector.shape_cast %4 : vector<64x1xf32> to vector<1x64x1xf32>
    %24 = arith.addf %22, %23 : vector<1x64x1xf32>
    %cst_14 = arith.constant 3.000000e+00 : f32
    %25 = vector.broadcast %cst_14 : f32 to vector<1x64x1xf32>
    %26 = arith.addf %24, %25 : vector<1x64x1xf32>
    %cst_15 = arith.constant 0.000000e+00 : f32
    %cst_16 = arith.constant 6.000000e+00 : f32
    %27 = vector.broadcast %cst_15 : f32 to vector<1x64x1xf32>
    %28 = arith.maximumf %27, %26 : vector<1x64x1xf32>
    %29 = vector.broadcast %cst_16 : f32 to vector<1x64x1xf32>
    %30 = arith.minimumf %29, %28 : vector<1x64x1xf32>
    %cst_17 = arith.constant 0.166666672 : f32
    %31 = vector.broadcast %cst_17 : f32 to vector<1x64x1xf32>
    %32 = arith.mulf %30, %31 : vector<1x64x1xf32>
    %33 = vector.extract_strided_slice %32 {offsets = [0, 0, 0], sizes = [1, 16, 1], strides = [1, 1, 1]} : vector<1x64x1xf32> to vector<1x16x1xf32>
    %cst_18 = arith.constant 5.000000e-01 : f32
    %34 = vector.broadcast %cst_18 : f32 to vector<1x16x1xf32>
    %35 = arith.subf %33, %34 : vector<1x16x1xf32>
    %cst_19 = arith.constant 2.000000e+00 : f32
    %36 = vector.broadcast %cst_19 : f32 to vector<1x16x1xf32>
    %37 = arith.mulf %35, %36 : vector<1x16x1xf32>
    %cst_20 = arith.constant 1.000000e+00 : f32
    %38 = vector.broadcast %cst_20 : f32 to vector<1x16x1xf32>
    %39 = arith.addf %37, %38 : vector<1x16x1xf32>
    %40 = vector.extract_strided_slice %32 {offsets = [0, 16, 0], sizes = [1, 16, 1], strides = [1, 1, 1]} : vector<1x64x1xf32> to vector<1x16x1xf32>
    %cst_21 = arith.constant 5.000000e-01 : f32
    %41 = vector.broadcast %cst_21 : f32 to vector<1x16x1xf32>
    %42 = arith.subf %40, %41 : vector<1x16x1xf32>
    %cst_22 = arith.constant 0.000000e+00 : f32
    %43 = vector.broadcast %cst_22 : f32 to vector<1x16x1xf32>
    %44 = arith.addf %42, %43 : vector<1x16x1xf32>
    %45 = vector.extract_strided_slice %32 {offsets = [0, 32, 0], sizes = [1, 16, 1], strides = [1, 1, 1]} : vector<1x64x1xf32> to vector<1x16x1xf32>
    %cst_23 = arith.constant 5.000000e-01 : f32
    %46 = vector.broadcast %cst_23 : f32 to vector<1x16x1xf32>
    %47 = arith.subf %45, %46 : vector<1x16x1xf32>
    %cst_24 = arith.constant 2.000000e+00 : f32
    %48 = vector.broadcast %cst_24 : f32 to vector<1x16x1xf32>
    %49 = arith.mulf %47, %48 : vector<1x16x1xf32>
    %cst_25 = arith.constant 0.000000e+00 : f32
    %50 = vector.broadcast %cst_25 : f32 to vector<1x16x1xf32>
    %51 = arith.addf %49, %50 : vector<1x16x1xf32>
    %52 = vector.extract_strided_slice %32 {offsets = [0, 48, 0], sizes = [1, 16, 1], strides = [1, 1, 1]} : vector<1x64x1xf32> to vector<1x16x1xf32>
    %cst_26 = arith.constant 5.000000e-01 : f32
    %53 = vector.broadcast %cst_26 : f32 to vector<1x16x1xf32>
    %54 = arith.subf %52, %53 : vector<1x16x1xf32>
    %cst_27 = arith.constant 0.000000e+00 : f32
    %55 = vector.broadcast %cst_27 : f32 to vector<1x16x1xf32>
    %56 = arith.addf %54, %55 : vector<1x16x1xf32>
    %57 = vector.broadcast %39 : vector<1x16x1xf32> to vector<1x16x256xf32>
    %58 = arith.mulf %0, %57 : vector<1x16x256xf32>
    %59 = vector.broadcast %44 : vector<1x16x1xf32> to vector<1x16x256xf32>
    %60 = arith.addf %58, %59 : vector<1x16x256xf32>
    %61 = vector.broadcast %51 : vector<1x16x1xf32> to vector<1x16x256xf32>
    %62 = arith.mulf %0, %61 : vector<1x16x256xf32>
    %63 = vector.broadcast %56 : vector<1x16x1xf32> to vector<1x16x256xf32>
    %64 = arith.addf %62, %63 : vector<1x16x256xf32>
    %65 = arith.maximumf %60, %64 : vector<1x16x256xf32>
    %c0_28 = arith.constant 0 : index
    %c0_29 = arith.constant 0 : index
    %c0_30 = arith.constant 0 : index
    %66 = vector.load %arg6[%c0_28, %c0_29, %c0_30] : memref<1x16x256xf32, #tpu.memory_space<vmem>>, vector<1x16x256xf32>
    tpu.vector_store %arg6[%c0_28, %c0_29, %c0_30], %65 {strides = array<i32>} : memref<1x16x256xf32, #tpu.memory_space<vmem>>, vector<1x16x256xf32>,
    return
  }
  func.func @transform_0(%arg0: i32) -> (i32, i32, i32) {
    %c0_i32 = arith.constant 0 : i32
    %c0_i32_0 = arith.constant 0 : i32
    %c0_i32_1 = arith.constant 0 : i32
    return %arg0, %c0_i32, %c0_i32_0 : i32, i32, i32
  }
  func.func @transform_1(%arg0: i32) -> (i32, i32) {
    %c0_i32 = arith.constant 0 : i32
    %c0_i32_0 = arith.constant 0 : i32
    %c0_i32_1 = arith.constant 0 : i32
    return %c0_i32, %c0_i32_0 : i32, i32
  }
  func.func @transform_2(%arg0: i32) -> (i32, i32) {
    %c0_i32 = arith.constant 0 : i32
    %c0_i32_0 = arith.constant 0 : i32
    %c0_i32_1 = arith.constant 0 : i32
    return %c0_i32, %c0_i32_0 : i32, i32
  }
  func.func @transform_3(%arg0: i32) -> (i32, i32) {
    %c0_i32 = arith.constant 0 : i32
    %c0_i32_0 = arith.constant 0 : i32
    %c0_i32_1 = arith.constant 0 : i32
    return %c0_i32, %c0_i32_0 : i32, i32
  }
  func.func @transform_4(%arg0: i32) -> (i32, i32) {
    %c0_i32 = arith.constant 0 : i32
    %c0_i32_0 = arith.constant 0 : i32
    %c0_i32_1 = arith.constant 0 : i32
    return %c0_i32, %c0_i32_0 : i32, i32
  }
  func.func @transform_5(%arg0: i32) -> (i32, i32, i32) {
    %c0_i32 = arith.constant 0 : i32
    %c0_i32_0 = arith.constant 0 : i32
    %c0_i32_1 = arith.constant 0 : i32
    return %arg0, %c0_i32, %c0_i32_0 : i32, i32, i32
  }
}

</mosaic_0001>

<llo_original>
// kernel: tpu_custom_call.1
$region0: #{tpu_custom_call.1}
  #allocation0 [shape = 'u32[]', space=smem, size = 0x4, offset = 0x4, fixed_abs, tag = 'smem constant byte address 0x4 - core index']
  #allocation1 [shape = 'u32[144,128]{1,0:T(1,128)}', space=vmem, size = 0x12000, scoped, tag = 'internal scratch']
  %s0 = inlined_call_operand.vmem [shape: f32[2,16,256], index: 0, kind: input, shape index: {}]
  %s1 = inlined_call_operand.vmem [shape: f32[16,4], index: 1, kind: input, shape index: {}]
  %s2 = inlined_call_operand.vmem [shape: f32[1,4], index: 2, kind: input, shape index: {}]
  %s3 = inlined_call_operand.vmem [shape: f32[64,4], index: 3, kind: input, shape index: {}]
  %s4 = inlined_call_operand.vmem [shape: f32[64,1], index: 4, kind: input, shape index: {}]
  %s5 = inlined_call_operand.hbm [shape: f32[2,16,256], index: 5, kind: output, shape index: {}]
  %s6 = sld [smem:[#allocation0]]
  $region53: #{tpu_custom_call.1} parent=0
    _
  %s8 = ssub.s32 1, %s6
  %s9 = scalar_select 0, %s8, %s6
  $region1: #{tpu_custom_call.1} parent=0
    #allocation2 [shape = 'u8[32768]{0}', space=vmem, size = 0x8000, scoped, tag = 'output window, operand 0']
    #allocation3 [shape = 's32[2]{0}', space=sflag, size = 0x8, scoped, tag = 'scoped memory for tpu_custom_call.1']
    %10 = vsyncpa [#allocation3], 0
    %s11 = scalar_lea.sflag [#allocation3], 1
    %12 = vsyncpa %s11, 0
    loop: start=0, step=1, limit=4
    $region2: #{tpu_custom_call.1} parent=1 // loop_pre_header
      _
    $region3: #{tpu_custom_call.1} parent=1 // loop_header
      %s14 = sphi 0, %s18
      %p15 = scmp.ge.s32.totalorder %s14, 4
      %s24 = sphi 0, %s26
      %s27 = sphi 0, %s24
      %s28 = sphi 0, %s27
      %s44 = sphi 0, %s28
      %s48 = sphi 0, %s48
      %s50 = sphi 0, %s48
      %s51 = sphi 0, %s50
      %s65 = sphi 0, %s51
      %s69 = sphi 0, %s69
      %s71 = sphi 0, %s69
      %s72 = sphi 0, %s71
      %s86 = sphi 0, %s72
      %s90 = sphi 0, %s90
      %s92 = sphi 0, %s90
      %s93 = sphi 0, %s92
      %s107 = sphi 0, %s93
      %s111 = sphi 0, %s111
      %s113 = sphi 0, %s111
      %s114 = sphi 0, %s113
      %s128 = sphi 0, %s114
      %s134 = sphi 0, %s136
      %s137 = sphi 0, %s134
      %s138 = sphi 0, %s137
      %s154 = sphi 0, %s138
    $region4: #{tpu_custom_call.1} parent=1 // loop_header_branch
      %17 = sbr.rel (%p15) target = $region8
    $region5: #{tpu_custom_call.1} parent=1 // loop_body
      %s19 = ssub.s32 %s14, 1
      %s20 = ssub.s32 %s14, 2
      %s21 = sadd.s32 %s14, 1
      %s22 = ssub.s32 %s14, %s21
      %p23 = scmp.eq.s32.totalorder %s22, 0
      %s25 = sadd.s32 %s24, 1
      %s26 = scalar_select %p23, %s24, %s25
      %p29 = pneg %p23
      %p30 = scmp.eq.s32.totalorder %s14, 1
      %p31 = por %p29, %p30
      %p32 = scmp.ne.s32.totalorder %s24, %s27
      %p33 = scmp.eq.s32.totalorder %s14, 0
      %p34 = por %p32, %p33
      %p35 = scmp.ne.s32.totalorder %s24, %s27
      %p36 = scmp.eq.s32.totalorder %s19, 1
      %p37 = por %p35, %p36
      %p38 = scmp.ne.s32.totalorder %s27, %s28
      %p39 = scmp.eq.s32.totalorder %s19, 0
      %p40 = por %p38, %p39
      %p41 = scmp.ne.s32.totalorder %s27, %s28
      %p42 = scmp.eq.s32.totalorder %s20, 1
      %p43 = por %p41, %p42
      %p45 = scmp.ne.s32.totalorder %s28, %s44
      %p46 = scmp.eq.s32.totalorder %s20, 0
      %p47 = por %p45, %p46
      %s49 = sadd.s32 %s48, 1
      %p52 = scmp.eq.s32.totalorder %s14, 1
      %p53 = scmp.ne.s32.totalorder %s48, %s50
      %p54 = scmp.eq.s32.totalorder %s14, 0
      %p55 = por %p53, %p54
      %p56 = scmp.ne.s32.totalorder %s48, %s50
      %p57 = scmp.eq.s32.totalorder %s19, 1
      %p58 = por %p56, %p57
      %p59 = scmp.ne.s32.totalorder %s50, %s51
      %p60 = scmp.eq.s32.totalorder %s19, 0
      %p61 = por %p59, %p60
      %p62 = scmp.ne.s32.totalorder %s50, %s51
      %p63 = scmp.eq.s32.totalorder %s20, 1
      %p64 = por %p62, %p63
      %p66 = scmp.ne.s32.totalorder %s51, %s65
      %p67 = scmp.eq.s32.totalorder %s20, 0
      %p68 = por %p66, %p67
      %s70 = sadd.s32 %s69, 1
      %p73 = scmp.eq.s32.totalorder %s14, 1
      %p74 = scmp.ne.s32.totalorder %s69, %s71
      %p75 = scmp.eq.s32.totalorder %s14, 0
      %p76 = por %p74, %p75
      %p77 = scmp.ne.s32.totalorder %s69, %s71
      %p78 = scmp.eq.s32.totalorder %s19, 1
      %p79 = por %p77, %p78
      %p80 = scmp.ne.s32.totalorder %s71, %s72
      %p81 = scmp.eq.s32.totalorder %s19, 0
      %p82 = por %p80, %p81
      %p83 = scmp.ne.s32.totalorder %s71, %s72
      %p84 = scmp.eq.s32.totalorder %s20, 1
      %p85 = por %p83, %p84
      %p87 = scmp.ne.s32.totalorder %s72, %s86
      %p88 = scmp.eq.s32.totalorder %s20, 0
      %p89 = por %p87, %p88
      %s91 = sadd.s32 %s90, 1
      %p94 = scmp.eq.s32.totalorder %s14, 1
      %p95 = scmp.ne.s32.totalorder %s90, %s92
      %p96 = scmp.eq.s32.totalorder %s14, 0
      %p97 = por %p95, %p96
      %p98 = scmp.ne.s32.totalorder %s90, %s92
      %p99 = scmp.eq.s32.totalorder %s19, 1
      %p100 = por %p98, %p99
      %p101 = scmp.ne.s32.totalorder %s92, %s93
      %p102 = scmp.eq.s32.totalorder %s19, 0
      %p103 = por %p101, %p102
      %p104 = scmp.ne.s32.totalorder %s92, %s93
      %p105 = scmp.eq.s32.totalorder %s20, 1
      %p106 = por %p104, %p105
      %p108 = scmp.ne.s32.totalorder %s93, %s107
      %p109 = scmp.eq.s32.totalorder %s20, 0
      %p110 = por %p108, %p109
      %s112 = sadd.s32 %s111, 1
      %p115 = scmp.eq.s32.totalorder %s14, 1
      %p116 = scmp.ne.s32.totalorder %s111, %s113
      %p117 = scmp.eq.s32.totalorder %s14, 0
      %p118 = por %p116, %p117
      %p119 = scmp.ne.s32.totalorder %s111, %s113
      %p120 = scmp.eq.s32.totalorder %s19, 1
      %p121 = por %p119, %p120
      %p122 = scmp.ne.s32.totalorder %s113, %s114
      %p123 = scmp.eq.s32.totalorder %s19, 0
      %p124 = por %p122, %p123
      %p125 = scmp.ne.s32.totalorder %s113, %s114
      %p126 = scmp.eq.s32.totalorder %s20, 1
      %p127 = por %p125, %p126
      %p129 = scmp.ne.s32.totalorder %s114, %s128
      %p130 = scmp.eq.s32.totalorder %s20, 0
      %p131 = por %p129, %p130
      %s132 = ssub.s32 %s14, %s21
      %p133 = scmp.eq.s32.totalorder %s132, 0
      %s135 = sadd.s32 %s134, 1
      %s136 = scalar_select %p133, %s134, %s135
      %p139 = pneg %p133
      %p140 = scmp.eq.s32.totalorder %s14, 1
      %p141 = por %p139, %p140
      %p142 = scmp.ne.s32.totalorder %s134, %s137
      %p143 = scmp.eq.s32.totalorder %s14, 0
      %p144 = por %p142, %p143
      %p145 = scmp.ne.s32.totalorder %s134, %s137
      %p146 = scmp.eq.s32.totalorder %s19, 1
      %p147 = por %p145, %p146
      %p148 = scmp.ne.s32.totalorder %s137, %s138
      %p149 = scmp.eq.s32.totalorder %s19, 0
      %p150 = por %p148, %p149
      %p151 = scmp.ne.s32.totalorder %s137, %s138
      %p152 = scmp.eq.s32.totalorder %s20, 1
      %p153 = por %p151, %p152
      %p155 = scmp.ne.s32.totalorder %s138, %s154
      %p156 = scmp.eq.s32.totalorder %s20, 0
      %p157 = por %p155, %p156
      %p158 = scmp.le.s32.totalorder 1, %s14
      %p159 = scmp.lt.s32.totalorder %s14, 3
      %p160 = pnand %p158, %p159
      %p161 = pneg %p160
      // Predicated region
      $region9: #{tpu_custom_call.1} parent=5 // pred_check
        _
      $region10: #{tpu_custom_call.1} parent=5 // pred_check_branch
        %163 = sbr.rel (%p160) target = $region12
      $region11: #{tpu_custom_call.1} parent=5 // pred_region
        %s164 = ssub.s32 %s14, 1
        // Predicated region
        $region13: #{tpu_custom_call.1} parent=11 // pred_check
          %p165 = pneg %p61
        $region14: #{tpu_custom_call.1} parent=11 // pred_check_branch
          %167 = sbr.rel (%p165) target = $region16
        $region15: #{tpu_custom_call.1} parent=11 // pred_region
          _
        $region16: #{tpu_custom_call.1} parent=11 // pred_fallthru
          _
        // Predicated region
        $region17: #{tpu_custom_call.1} parent=11 // pred_check
          %p168 = pneg %p82
        $region18: #{tpu_custom_call.1} parent=11 // pred_check_branch
          %170 = sbr.rel (%p168) target = $region20
        $region19: #{tpu_custom_call.1} parent=11 // pred_region
          _
        $region20: #{tpu_custom_call.1} parent=11 // pred_fallthru
          _
        // Predicated region
        $region21: #{tpu_custom_call.1} parent=11 // pred_check
          %p171 = pneg %p103
        $region22: #{tpu_custom_call.1} parent=11 // pred_check_branch
          %173 = sbr.rel (%p171) target = $region24
        $region23: #{tpu_custom_call.1} parent=11 // pred_region
          _
        $region24: #{tpu_custom_call.1} parent=11 // pred_fallthru
          _
        // Predicated region
        $region25: #{tpu_custom_call.1} parent=11 // pred_check
          %p174 = pneg %p124
        $region26: #{tpu_custom_call.1} parent=11 // pred_check_branch
          %176 = sbr.rel (%p174) target = $region28
        $region27: #{tpu_custom_call.1} parent=11 // pred_region
          _
        $region28: #{tpu_custom_call.1} parent=11 // pred_fallthru
          _
      $region12: #{tpu_custom_call.1} parent=5 // pred_fallthru
        _
      %p177 = scmp.lt.s32.totalorder %s14, 2
      // Predicated region
      $region29: #{tpu_custom_call.1} parent=5 // pred_check
        %p178 = pneg %p177
      $region30: #{tpu_custom_call.1} parent=5 // pred_check_branch
        %180 = sbr.rel (%p178) target = $region32
      $region31: #{tpu_custom_call.1} parent=5 // pred_region
        // Predicated region
        $region33: #{tpu_custom_call.1} parent=31 // pred_check
          %p181 = pneg %p34
        $region34: #{tpu_custom_call.1} parent=31 // pred_check_branch
          %183 = sbr.rel (%p181) target = $region36
        $region35: #{tpu_custom_call.1} parent=31 // pred_region
          %p184 = scmp.lt.s32.totalorder %s14, 1
          %s185 = scalar_select %p184, %s14, 1
          %s186 = smul.addr %s185, 4
          %s187 = smul.addr %s186, 8
          %s188 = scalar_lea.vmem %s0, %s187
        $region36: #{tpu_custom_call.1} parent=31 // pred_fallthru
          _
      $region32: #{tpu_custom_call.1} parent=5 // pred_fallthru
        _
      %p189 = scmp.le.s32.totalorder 1, %s14
      %p190 = scmp.lt.s32.totalorder %s14, 3
      %p191 = pnand %p189, %p190
      %p192 = pneg %p191
      // Predicated region
      $region37: #{tpu_custom_call.1} parent=5 // pred_check
        _
      $region38: #{tpu_custom_call.1} parent=5 // pred_check_branch
        %194 = sbr.rel (%p191) target = $region40
      $region39: #{tpu_custom_call.1} parent=5 // pred_region
        %s195 = ssub.s32 %s14, 1
        %p196 = scmp.lt.s32.totalorder %s19, 1
        %s197 = scalar_select %p196, %s19, 1
        %s198 = smul.addr %s197, 4
        %s199 = smul.addr %s198, 8
        %s200 = scalar_lea.vmem %s0, %s199
        %p201 = pneg %p40
        %p202 = pneg %p37
        %p203 = pneg %p61
        %p204 = pneg %p58
        %p205 = pneg %p82
        %p206 = pneg %p79
        %p207 = pneg %p103
        %p208 = pneg %p100
        %p209 = pneg %p124
        %p210 = pneg %p121
        %p211 = pneg %p150
        %p212 = pneg %p147
        %s213 = sand.u32 %s137, 1
        %s214 = scalar_lea.sflag [#allocation3], %s213
        %s215 = sand.u32 %s137, 1
        %s216 = smul.addr %s215, 32
        %s217 = scalar_lea.vmem [#allocation2], %s216
        %p218 = scmp.lt.s32.totalorder %s19, 1
        %s219 = scalar_select %p218, %s19, 1
        %s220 = smul.addr %s219, 4
        %s221 = smul.addr %s220, 8
        %s222 = scalar_lea.vmem %s0, %s221
        %v223 = vld [vmem:[%s222] sm:$0xff]
        %v224 = vld [vmem:[%s222 + $0x8] sm:$0xff]
        %v225 = vld [vmem:[%s222 + $0x10] sm:$0xff]
        %v226 = vld [vmem:[%s222 + $0x18] sm:$0xff]
        %v227 = vld [vmem:[%s1] sm:$0xff]
        %v228 = vld [vmem:[%s1 + $0x8] sm:$0xff]
        %v229 = vld [vmem:[%s2] sm:$0x1]
        %v230 = vld [vmem:[%s3] sm:$0xff]
        %v231 = vld [vmem:[%s3 + $0x8] sm:$0xff]
        %v232 = vld [vmem:[%s3 + $0x10] sm:$0xff]
        %v233 = vld [vmem:[%s3 + $0x18] sm:$0xff]
        %v234 = vld [vmem:[%s3 + $0x20] sm:$0xff]
        %v235 = vld [vmem:[%s3 + $0x28] sm:$0xff]
        %v236 = vld [vmem:[%s3 + $0x30] sm:$0xff]
        %v237 = vld [vmem:[%s3 + $0x38] sm:$0xff]
        %v238 = vld [vmem:[%s4] sm:$0xff]
        %v239 = vld [vmem:[%s4 + $0x8] sm:$0xff]
        %v240 = vld [vmem:[%s4 + $0x10] sm:$0xff]
        %v241 = vld [vmem:[%s4 + $0x18] sm:$0xff]
        %v242 = vld [vmem:[%s4 + $0x20] sm:$0xff]
        %v243 = vld [vmem:[%s4 + $0x28] sm:$0xff]
        %v244 = vld [vmem:[%s4 + $0x30] sm:$0xff]
        %v245 = vld [vmem:[%s4 + $0x38] sm:$0xff]
        %v246 = vadd.f32 %v223, %v224
        %247 = vadd.xlane.f32.xlu0 %v246
        %v248 = vpop.xlane.xlu0 %247
        %v249 = vadd.f32 %v225, %v226
        %250 = vadd.xlane.f32.xlu0 %v249
        %v251 = vpop.xlane.xlu0 %250
        %v252 = vmul.f32 %v248, 0.00390625
        %v253 = vmul.f32 %v251, 0.00390625
        %v254 = vmul.f32 %v227, %v252
        %v255 = vmul.f32 %v228, %v253
        %vm256 = vcmask 31744
        %v257 = vsel %vm256, %v254, 0.0
        %v258 = vsel %vm256, %v255, 0.0
        %v259 = vadd.f32 %v257, %v258
        %v260 = vrot.slane %v259, 4
        %v261 = vadd.f32 %v259, %v260
        %v262 = vrot.slane %v261, 2
        %v263 = vadd.f32 %v261, %v262
        %v264 = vrot.slane %v263, 1
        %v265 = vadd.f32 %v263, %v264
        %v266 = vadd.f32 %v265, %v229
        %v267 = vmax.f32 %v266, 0.0
        %v268 = vlaneseq
        %v269 = vshrl.u32 %v268, 7
        %v270 = vsub.s32 0, %v269
        %v271 = vrot.slane %v267, %v270
        %v272 = vmul.f32 %v230, %v271
        %v273 = vmul.f32 %v231, %v271
        %v274 = vmul.f32 %v232, %v271
        %v275 = vmul.f32 %v233, %v271
        %v276 = vmul.f32 %v234, %v271
        %v277 = vmul.f32 %v235, %v271
        %v278 = vmul.f32 %v236, %v271
        %v279 = vmul.f32 %v237, %v271
        %v280 = vsel %vm256, %v272, 0.0
        %281 = vadd.xlane.f32.xlu0 %v280
        %v282 = vpop.xlane.xlu0 %281
        %v283 = vsel %vm256, %v273, 0.0
        %284 = vadd.xlane.f32.xlu0 %v283
        %v285 = vpop.xlane.xlu0 %284
        %v286 = vsel %vm256, %v274, 0.0
        %287 = vadd.xlane.f32.xlu0 %v286
        %v288 = vpop.xlane.xlu0 %287
        %v289 = vsel %vm256, %v275, 0.0
        %290 = vadd.xlane.f32.xlu0 %v289
        %v291 = vpop.xlane.xlu0 %290
        %v292 = vsel %vm256, %v276, 0.0
        %293 = vadd.xlane.f32.xlu0 %v292
        %v294 = vpop.xlane.xlu0 %293
        %v295 = vsel %vm256, %v277, 0.0
        %296 = vadd.xlane.f32.xlu0 %v295
        %v297 = vpop.xlane.xlu0 %296
        %v298 = vsel %vm256, %v278, 0.0
        %299 = vadd.xlane.f32.xlu0 %v298
        %v300 = vpop.xlane.xlu0 %299
        %v301 = vsel %vm256, %v279, 0.0
        %302 = vadd.xlane.f32.xlu0 %v301
        %v303 = vpop.xlane.xlu0 %302
        %v304 = vadd.f32 %v282, %v238
        %v305 = vadd.f32 %v285, %v239
        %v306 = vadd.f32 %v288, %v240
        %v307 = vadd.f32 %v291, %v241
        %v308 = vadd.f32 %v294, %v242
        %v309 = vadd.f32 %v297, %v243
        %v310 = vadd.f32 %v300, %v244
        %v311 = vadd.f32 %v303, %v245
        %v312 = vadd.f32 %v304, 3.0
        %v313 = vadd.f32 %v305, 3.0
        %v314 = vadd.f32 %v306, 3.0
        %v315 = vadd.f32 %v307, 3.0
        %v316 = vadd.f32 %v308, 3.0
        %v317 = vadd.f32 %v309, 3.0
        %v318 = vadd.f32 %v310, 3.0
        %v319 = vadd.f32 %v311, 3.0
        %v320 = vmax.f32 %v312, 0.0
        %v321 = vmax.f32 %v313, 0.0
        %v322 = vmax.f32 %v314, 0.0
        %v323 = vmax.f32 %v315, 0.0
        %v324 = vmax.f32 %v316, 0.0
        %v325 = vmax.f32 %v317, 0.0
        %v326 = vmax.f32 %v318, 0.0
        %v327 = vmax.f32 %v319, 0.0
        %v328 = vmin.f32 %v320, 6.0
        %v329 = vmin.f32 %v321, 6.0
        %v330 = vmin.f32 %v322, 6.0
        %v331 = vmin.f32 %v323, 6.0
        %v332 = vmin.f32 %v324, 6.0
        %v333 = vmin.f32 %v325, 6.0
        %v334 = vmin.f32 %v326, 6.0
        %v335 = vmin.f32 %v327, 6.0
        %v336 = vmul.f32 %v328, 0.16666667
        %v337 = vmul.f32 %v329, 0.16666667
        %v338 = vmul.f32 %v330, 0.16666667
        %v339 = vmul.f32 %v331, 0.16666667
        %v340 = vmul.f32 %v332, 0.16666667
        %v341 = vmul.f32 %v333, 0.16666667
        %v342 = vmul.f32 %v334, 0.16666667
        %v343 = vmul.f32 %v335, 0.16666667
        %v344 = vsub.f32 %v336, 0.5
        %v345 = vsub.f32 %v337, 0.5
        %v346 = vmul.f32 %v344, 2.0
        %v347 = vmul.f32 %v345, 2.0
        %v348 = vadd.f32 %v346, 1.0
        %v349 = vadd.f32 %v347, 1.0
        %v350 = vsub.f32 %v338, 0.5
        %v351 = vsub.f32 %v339, 0.5
        %v352 = vadd.f32 %v350, 0.0
        %v353 = vadd.f32 %v351, 0.0
        %v354 = vsub.f32 %v340, 0.5
        %v355 = vsub.f32 %v341, 0.5
        %v356 = vmul.f32 %v354, 2.0
        %v357 = vmul.f32 %v355, 2.0
        %v358 = vadd.f32 %v356, 0.0
        %v359 = vadd.f32 %v357, 0.0
        %v360 = vsub.f32 %v342, 0.5
        %v361 = vsub.f32 %v343, 0.5
        %v362 = vadd.f32 %v360, 0.0
        %v363 = vadd.f32 %v361, 0.0
        %365 = vset.pattern.permute.xlu0 0
        %366 = vperm.xlu0 %365, %v348
        %v367 = vpop.permute.xlu0 %366
        %370 = vset.pattern.permute.xlu0 0
        %371 = vperm.xlu0 %370, %v349
        %v372 = vpop.permute.xlu0 %371
        %v374 = vmul.f32 %v223, %v367
        %v375 = vmul.f32 %v224, %v367
        %v376 = vmul.f32 %v225, %v372
        %v377 = vmul.f32 %v226, %v372
        %379 = vset.pattern.permute.xlu0 0
        %380 = vperm.xlu0 %379, %v352
        %v381 = vpop.permute.xlu0 %380
        %384 = vset.pattern.permute.xlu0 0
        %385 = vperm.xlu0 %384, %v353
        %v386 = vpop.permute.xlu0 %385
        %v388 = vadd.f32 %v374, %v381
        %v389 = vadd.f32 %v375, %v381
        %v390 = vadd.f32 %v376, %v386
        %v391 = vadd.f32 %v377, %v386
        %393 = vset.pattern.permute.xlu0 0
        %394 = vperm.xlu0 %393, %v358
        %v395 = vpop.permute.xlu0 %394
        %398 = vset.pattern.permute.xlu0 0
        %399 = vperm.xlu0 %398, %v359
        %v400 = vpop.permute.xlu0 %399
        %v402 = vmul.f32 %v223, %v395
        %v403 = vmul.f32 %v224, %v395
        %v404 = vmul.f32 %v225, %v400
        %v405 = vmul.f32 %v226, %v400
        %407 = vset.pattern.permute.xlu0 0
        %408 = vperm.xlu0 %407, %v362
        %v409 = vpop.permute.xlu0 %408
        %412 = vset.pattern.permute.xlu0 0
        %413 = vperm.xlu0 %412, %v363
        %v414 = vpop.permute.xlu0 %413
        %v416 = vadd.f32 %v402, %v409
        %v417 = vadd.f32 %v403, %v409
        %v418 = vadd.f32 %v404, %v414
        %v419 = vadd.f32 %v405, %v414
        %v420 = vmax.f32 %v388, %v416
        %v421 = vmax.f32 %v389, %v417
        %v422 = vmax.f32 %v390, %v418
        %v423 = vmax.f32 %v391, %v419
        %424 = vst [vmem:[%s217] sm:$0xff] %v420
        %425 = vst [vmem:[%s217 + $0x8] sm:$0xff] %v421
        %426 = vst [vmem:[%s217 + $0x10] sm:$0xff] %v422
        %427 = vst [vmem:[%s217 + $0x18] sm:$0xff] %v423
        %s428 = sand.u32 %s137, 1
        %s429 = scalar_lea.sflag [#allocation3], %s428
        %s430 = sand.u32 %s137, 1
        %s431 = smul.addr %s430, 32
        %s432 = scalar_lea.vmem [#allocation2], %s431
        // Predicated region
        $region41: #{tpu_custom_call.1} parent=39 // pred_check
          %p433 = pneg %p147
        $region42: #{tpu_custom_call.1} parent=39 // pred_check_branch
          %435 = sbr.rel (%p433) target = $region44
        $region43: #{tpu_custom_call.1} parent=39 // pred_region
          %s437 = ssub.s32 512, 512
          %438 = vsyncadd %s429, %s437
          %s439 = smul.addr %s19, 4
          %s440 = smul.addr %s439, 128
          %s441 = scalar_lea.hbm %s5, %s440
          %s442 = sshll.u32 %s432, 4
          %s443 = int_to_ptr.vmem [resolvable:$true] %s442
          %448 = dma.vmem_to_hbm [thread:$0]  %s443, 512, %s441, %s429, 256, 256, 16
        $region44: #{tpu_custom_call.1} parent=39 // pred_fallthru
          _
      $region40: #{tpu_custom_call.1} parent=5 // pred_fallthru
        _
      %p449 = scmp.le.s32.totalorder 2, %s14
      // Predicated region
      $region45: #{tpu_custom_call.1} parent=5 // pred_check
        %p450 = pneg %p449
      $region46: #{tpu_custom_call.1} parent=5 // pred_check_branch
        %452 = sbr.rel (%p450) target = $region48
      $region47: #{tpu_custom_call.1} parent=5 // pred_region
        %s453 = ssub.s32 %s14, 2
        // Predicated region
        $region49: #{tpu_custom_call.1} parent=47 // pred_check
          %p454 = pneg %p153
        $region50: #{tpu_custom_call.1} parent=47 // pred_check_branch
          %456 = sbr.rel (%p454) target = $region52
        $region51: #{tpu_custom_call.1} parent=47 // pred_region
          %s457 = sand.u32 %s138, 1
          %s458 = scalar_lea.sflag [#allocation3], %s457
          %s459 = sand.u32 %s138, 1
          %s460 = smul.addr %s459, 32
          %s461 = scalar_lea.vmem [#allocation2], %s460
          %462 = dma.done %s458, 512
        $region52: #{tpu_custom_call.1} parent=47 // pred_fallthru
          _
      $region48: #{tpu_custom_call.1} parent=5 // pred_fallthru
        _
    $region6: #{tpu_custom_call.1} parent=1 // loop_footer
      %s18 = sadd.s32 1, %s14
    $region7: #{tpu_custom_call.1} parent=1 // loop_footer_branch
      %13 = sbr.rel target = $region3
    $region8: #{tpu_custom_call.1} parent=1 // loop_exit
      _
    %463 = vsyncpa [#allocation3], 1
    %s464 = scalar_lea.sflag [#allocation3], 1
    %465 = vsyncpa %s464, 1

</llo_original>
